<compile_context>
chip_gen: v7x
topology: tpu7x:2x2x1
jax: 0.10.0
libtpu: 0.0.40
codegen_flags: <defaults>
</compile_context>

<pallas_src>
import jax
import jax.numpy as jnp
from jax.experimental import pallas as pl
from jax.experimental.pallas import tpu as pltpu


def _round_up(x, m):
    return (x + m - 1) // m * m


def _gemm_bias_relu_kernel(w_ref, b_ref, p_ref, o_ref):
    # w_ref : (TN, Kd)  folded conv weight (compute dtype), resident per Cout tile
    # b_ref : (TN, 1)   bias (f32), resident per Cout tile
    # p_ref : (Kd, TM)  im2col patch tile (compute dtype), lane-dense
    # o_ref : (TN, TM)  output tile, lane-dense
    acc = jnp.dot(w_ref[...], p_ref[...], preferred_element_type=jnp.float32)
    acc = acc + b_ref[...]            # broadcast (TN, 1) over lanes
    o_ref[...] = jnp.maximum(acc, 0.0).astype(o_ref.dtype)   # fused ReLU


def _gen_params(compute_dtype):
    """Generation-aware (TM target, VMEM budget in bytes)."""
    bf16 = jnp.dtype(compute_dtype) == jnp.dtype(jnp.bfloat16)
    try:
        kind = jax.devices()[0].device_kind.lower()
    except Exception:
        kind = ""
    if ("v7" in kind) or ("7x" in kind) or kind.startswith("tpu7"):
        # v7x: 64 MiB VMEM per TensorCore -> keep the scoped limit well below.
        return (1024 if bf16 else 512), 48 * 1024 * 1024
    if any(g in kind for g in ("v4", "v5", "v6")):
        # 128 MiB VMEM chips: push tiles bigger and raise the scoped limit.
        return (2048 if bf16 else 1024), 96 * 1024 * 1024
    # Unknown backend: stay conservative.
    return 512, 32 * 1024 * 1024


def _vmem_estimate(tn, kd, tm, in_bytes, out_bytes):
    """Double-buffered footprint of one grid step under the default pipeline."""
    w = 2 * tn * kd * in_bytes          # weight block (index-invariant along M)
    b = 2 * tn * 4                      # bias block
    p = 2 * kd * tm * in_bytes          # patch tile
    o = 2 * tn * tm * out_bytes         # output tile
    return w + b + p + o


def basic_conv(x_nchw, weight, bias, *, stride=1,
               compute_dtype=jnp.bfloat16, tm=None):
    """BasicConv forward: Conv2d(padding=k//2, stride) + bias + ReLU.

    x_nchw : (N, Cin, H, W)       (PyTorch NCHW layout)
    weight : (Cout, Cin, KH, KW)  (PyTorch Conv2d weight layout)
    bias   : (Cout,)
    returns: (N, Cout, Ho, Wo)    NCHW, matching nn.Conv2d semantics.

    compute_dtype: dtype of the GEMM operands (accumulation is always f32).
                   bf16 (default) halves HBM traffic; use f32 for exact parity.
    tm           : optional override of the output-position tile (multiple of 128).
    """
    n, cin, h, w = x_nchw.shape
    cout, cin_w, kh, kw = weight.shape
    assert cin == cin_w
    pad = kh // 2  # BasicConv always uses padding = kernel_size // 2

    ho = (h + 2 * pad - kh) // stride + 1
    wo = (w + 2 * pad - kw) // stride + 1
    m = n * ho * wo
    kd = kh * kw * cin
    out_dtype = x_nchw.dtype
    in_bytes = jnp.dtype(compute_dtype).itemsize
    out_bytes = jnp.dtype(out_dtype).itemsize

    # ---- Cout tiling (second parallel grid axis) ---------------------------
    if cout > 256 and cout % 256 == 0:
        tn = 256
    elif cout > 128 and cout % 128 == 0:
        tn = 128
    else:
        tn = cout
    grid_n = cout // tn

    # ---- generation-aware TM / VMEM budget ---------------------------------
    tm_target, vmem_budget = _gen_params(compute_dtype)
    if tm is not None:
        tm_target = _round_up(tm, 128)
    tm_eff = min(tm_target, _round_up(m, 128))
    # Shrink TM until the double-buffered tiles fit the per-generation budget.
    while tm_eff > 128 and _vmem_estimate(tn, kd, tm_eff, in_bytes, out_bytes) \
            > vmem_budget - 4 * 1024 * 1024:
        tm_eff = max(128, (tm_eff // 2) // 128 * 128)
    grid_m = pl.cdiv(m, tm_eff)
    # v7x splits only "parallel" axes across its 2 TensorCores: make sure the
    # parallel grid has >= 2 programs whenever the problem allows it.
    if grid_n * grid_m < 2 and m >= 256:
        tm_eff = _round_up(pl.cdiv(m, 2), 128)
        grid_m = pl.cdiv(m, tm_eff)
    m_pad = grid_m * tm_eff

    # ---- wrapper-side layout plumbing (plain XLA; nothing in-kernel) -------
    # Cast first so every materialized intermediate is already compute_dtype.
    x_c = x_nchw.astype(compute_dtype)
    x_padded = jnp.pad(x_c, ((0, 0), (0, 0), (pad, pad), (pad, pad)))
    taps = []
    for dh in range(kh):
        for dw in range(kw):
            taps.append(x_padded[:, :,
                                 dh:dh + (ho - 1) * stride + 1:stride,
                                 dw:dw + (wo - 1) * stride + 1:stride])
    # (KH*KW, N, Cin, Ho, Wo) -> (KH*KW, Cin, N, Ho, Wo) -> (Kd, M)
    patches = jnp.stack(taps, axis=0).transpose(0, 2, 1, 3, 4).reshape(kd, m)
    if m_pad != m:
        # Rare path: only hit when TM does not divide N*Ho*Wo (the TM selection
        # above prefers divisors, so typical shapes skip this extra copy).
        patches = jnp.pad(patches, ((0, 0), (0, m_pad - m)))

    # Fold conv weight to (Cout, Kd) with the same (tap-major, cin-minor) order.
    w2d = weight.transpose(0, 2, 3, 1).reshape(cout, kd).astype(compute_dtype)
    b2d = bias.reshape(cout, 1).astype(jnp.float32)

    out2d = pl.pallas_call(
        _gemm_bias_relu_kernel,
        out_shape=jax.ShapeDtypeStruct((cout, m_pad), out_dtype),
        grid=(grid_n, grid_m),
        in_specs=[
            pl.BlockSpec((tn, kd), lambda j, i: (j, 0)),      # weight: per-Cout-tile resident
            pl.BlockSpec((tn, 1), lambda j, i: (j, 0)),       # bias:   per-Cout-tile resident
            pl.BlockSpec((kd, tm_eff), lambda j, i: (0, i)),  # patch tile (lane-dense)
        ],
        out_specs=pl.BlockSpec((tn, tm_eff), lambda j, i: (j, i)),
        compiler_params=pltpu.CompilerParams(
            dimension_semantics=("parallel", "parallel"),  # v7x: split across 2 TCs
            vmem_limit_bytes=vmem_budget,
        ),
    )(w2d, b2d, patches)

    # (Cout, M) -> (N, Cout, Ho, Wo)
    return out2d[:, :m].reshape(cout, n, ho, wo).transpose(1, 0, 2, 3)


def _reference(x_nchw, weight, bias, *, stride=1):
    """Pure-JAX reference identical to nn.Conv2d(padding=k//2) + bias + ReLU."""
    pad = weight.shape[2] // 2
    out = jax.lax.conv_general_dilated(
        x_nchw, weight,
        window_strides=(stride, stride),
        padding=[(pad, pad), (pad, pad)],
        dimension_numbers=("NCHW", "OIHW", "NCHW"),
    )
    out = out + bias.reshape(1, -1, 1, 1)
    return jnp.maximum(out, 0.0)


if __name__ == "__main__":
    # Deterministic synthetic parameters / inputs (BasicConv(4, 8, 3, 1)).
    N, CIN, COUT, H, W, K = 2, 4, 8, 16, 16, 3

    key = jax.random.PRNGKey(0)
    kx, kw_, kb = jax.random.split(key, 3)
    x = jax.random.normal(kx, (N, CIN, H, W), dtype=jnp.float32)
    weight = 0.1 * jax.random.normal(kw_, (COUT, CIN, K, K), dtype=jnp.float32)
    bias = 0.05 * jax.random.normal(kb, (COUT,), dtype=jnp.float32)

    # Default bf16-compute path (f32 accumulation), stride 1 and 2.
    for s in (1, 2):
        out = jax.block_until_ready(basic_conv(x, weight, bias, stride=s))
        ref = jax.block_until_ready(_reference(x, weight, bias, stride=s))
        assert out.shape == ref.shape, (out.shape, ref.shape)
        err = float(jnp.max(jnp.abs(out - ref)))
        assert err < 3e-2, f"stride={s} bf16 mismatch vs reference: max abs err {err}"

    # f32-compute path for tight parity with nn.Conv2d.
    out32 = jax.block_until_ready(
        basic_conv(x, weight, bias, stride=1, compute_dtype=jnp.float32))
    ref32 = jax.block_until_ready(_reference(x, weight, bias, stride=1))
    err32 = float(jnp.max(jnp.abs(out32 - ref32)))
    assert err32 < 2e-3, f"stride=1 f32 mismatch vs reference: max abs err {err32}"

    print("KERNEL_OK")
</pallas_src>

<mosaic_0001>
module attributes {stable_mosaic.version = 11 : i64} {
  func.func @_gemm_bias_relu_kernel(%arg0: i32, %arg1: i32, %arg2: memref<8x36xbf16, #tpu.memory_space<vmem>>, %arg3: memref<8x1xf32, #tpu.memory_space<vmem>>, %arg4: memref<36x256xbf16, #tpu.memory_space<vmem>>, %arg5: memref<8x256xf32, #tpu.memory_space<vmem>>) attributes {dimension_semantics = [#tpu.dimension_semantics<parallel>, #tpu.dimension_semantics<parallel>], iteration_bounds = array<i64: 1, 2>, scalar_prefetch = 0 : i64, scratch_operands = 0 : i64, tpu.core_type = #tpu.core_type<tc>, window_params = [{transform_indices = @transform_0, window_bounds = array<i64: 8, 36>}, {transform_indices = @transform_1, window_bounds = array<i64: 8, 1>}, {transform_indices = @transform_2, window_bounds = array<i64: 36, 256>}, {transform_indices = @transform_3, window_bounds = array<i64: 8, 256>}]} {
    %c0 = arith.constant 0 : index
    %c0_0 = arith.constant 0 : index
    %0 = vector.load %arg2[%c0, %c0_0] : memref<8x36xbf16, #tpu.memory_space<vmem>>, vector<8x36xbf16>
    %c0_1 = arith.constant 0 : index
    %c0_2 = arith.constant 0 : index
    %1 = vector.load %arg4[%c0_1, %c0_2] : memref<36x256xbf16, #tpu.memory_space<vmem>>, vector<36x256xbf16>
    %cst = arith.constant dense<0.000000e+00> : vector<8x256xf32>
    %2 = tpu.matmul %0, %1, %cst {dimension_numbers = #tpu.dot_dimension_numbers<[1], [0], [0], [1], [0, 0, 1, 1], [], []>} : vector<8x36xbf16>, vector<36x256xbf16>, vector<8x256xf32> -> vector<8x256xf32>
    %c0_3 = arith.constant 0 : index
    %c0_4 = arith.constant 0 : index
    %3 = vector.load %arg3[%c0_3, %c0_4] : memref<8x1xf32, #tpu.memory_space<vmem>>, vector<8x1xf32>
    %4 = vector.broadcast %3 : vector<8x1xf32> to vector<8x256xf32>
    %5 = arith.addf %2, %4 : vector<8x256xf32>
    %cst_5 = arith.constant 0.000000e+00 : f32
    %6 = vector.broadcast %cst_5 : f32 to vector<8x256xf32>
    %7 = arith.maximumf %5, %6 : vector<8x256xf32>
    %c0_6 = arith.constant 0 : index
    %c0_7 = arith.constant 0 : index
    %8 = vector.load %arg5[%c0_6, %c0_7] : memref<8x256xf32, #tpu.memory_space<vmem>>, vector<8x256xf32>
    tpu.vector_store %arg5[%c0_6, %c0_7], %7 {strides = array<i32>} : memref<8x256xf32, #tpu.memory_space<vmem>>, vector<8x256xf32>,
    return
  }
  func.func @transform_0(%arg0: i32, %arg1: i32) -> (i32, i32) {
    %c0_i32 = arith.constant 0 : i32
    %c0_i32_0 = arith.constant 0 : i32
    return %arg0, %c0_i32 : i32, i32
  }
  func.func @transform_1(%arg0: i32, %arg1: i32) -> (i32, i32) {
    %c0_i32 = arith.constant 0 : i32
    %c0_i32_0 = arith.constant 0 : i32
    return %arg0, %c0_i32 : i32, i32
  }
  func.func @transform_2(%arg0: i32, %arg1: i32) -> (i32, i32) {
    %c0_i32 = arith.constant 0 : i32
    %c0_i32_0 = arith.constant 0 : i32
    return %c0_i32, %arg1 : i32, i32
  }
  func.func @transform_3(%arg0: i32, %arg1: i32) -> (i32, i32) {
    %c0_i32 = arith.constant 0 : i32
    return %arg0, %arg1 : i32, i32
  }
}

</mosaic_0001>

<llo_original>
// kernel: tpu_custom_call.1
$region0: #{tpu_custom_call.1}
  #allocation0 [shape = 'u32[]', space=smem, size = 0x4, offset = 0x4, fixed_abs, tag = 'smem constant byte address 0x4 - core index']
  #allocation1 [shape = 'u32[144,128]{1,0:T(1,128)}', space=vmem, size = 0x12000, scoped, tag = 'internal scratch']
  %s0 = inlined_call_operand.vmem [shape: bf16[8,36], index: 0, kind: input, shape index: {}]
  %s1 = inlined_call_operand.vmem [shape: f32[8,1], index: 1, kind: input, shape index: {}]
  %s2 = inlined_call_operand.hbm [shape: bf16[36,512], index: 2, kind: input, shape index: {}]
  %s3 = inlined_call_operand.hbm [shape: f32[8,512], index: 3, kind: output, shape index: {}]
  %s4 = sld [smem:[#allocation0]]
  $region49: #{tpu_custom_call.1} parent=0
    _
  %s6 = ssub.s32 1, %s4
  %s7 = scalar_select 0, %s6, %s4
  $region1: #{tpu_custom_call.1} parent=0
    #allocation2 [shape = 'u8[40960]{0}', space=vmem, size = 0xa000, scoped, tag = 'input window, operand 2']
    #allocation3 [shape = 's32[2]{0}', space=sflag, size = 0x8, scoped, tag = 'scoped memory for tpu_custom_call.1']
    #allocation4 [shape = 's32[2]{0}', space=sflag, size = 0x8, scoped, tag = 'scoped memory for tpu_custom_call.1']
    #allocation5 [shape = 'u8[16384]{0}', space=vmem, size = 0x4000, scoped, tag = 'output window, operand 0']
    %8 = vsyncpa [#allocation3], 0
    %s9 = scalar_lea.sflag [#allocation3], 1
    %10 = vsyncpa %s9, 0
    %11 = vsyncpa [#allocation4], 0
    %s12 = scalar_lea.sflag [#allocation4], 1
    %13 = vsyncpa %s12, 0
    loop: start=0, step=1, limit=4
    $region2: #{tpu_custom_call.1} parent=1 // loop_pre_header
      _
    $region3: #{tpu_custom_call.1} parent=1 // loop_header
      %s15 = sphi 0, %s19
      %p16 = scmp.ge.s32.totalorder %s15, 4
      %s22 = sphi 0, %s34
      %s23 = sphi 0, %s30
      %s24 = sphi 0, %s22
      %s25 = sphi 0, %s23
      %s26 = sphi 0, %s24
      %s27 = sphi 0, %s25
      %s37 = sphi 0, %s39
      %s40 = sphi 0, %s37
      %s41 = sphi 0, %s40
      %s57 = sphi 0, %s41
      %s63 = sphi 0, %s65
      %s66 = sphi 0, %s63
      %s67 = sphi 0, %s66
      %s83 = sphi 0, %s67
      %s89 = sphi 0, %s91
      %s92 = sphi 0, %s89
      %s93 = sphi 0, %s92
      %s109 = sphi 0, %s93
      %s117 = sphi 0, %s119
      %s120 = sphi 0, %s117
      %s121 = sphi 0, %s120
      %s137 = sphi 0, %s121
    $region4: #{tpu_custom_call.1} parent=1 // loop_header_branch
      %18 = sbr.rel (%p16) target = $region8
    $region5: #{tpu_custom_call.1} parent=1 // loop_body
      %s20 = ssub.s32 %s15, 1
      %s21 = ssub.s32 %s15, 2
      %s28 = sadd.s32 1, %s23
      %p29 = scmp.ge.s32.totalorder %s28, 2
      %s30 = scalar_select %p29, 0, %s28
      %s31 = sadd.s32 1, %s22
      %s32 = scalar_select %p29, %s31, %s22
      %p33 = scmp.ge.s32.totalorder %s32, 1
      %s34 = scalar_select %p33, 0, %s32
      %s35 = ssub.s32 %s22, %s34
      %p36 = scmp.eq.s32.totalorder %s35, 0
      %s38 = sadd.s32 %s37, 1
      %s39 = scalar_select %p36, %s37, %s38
      %p42 = pneg %p36
      %p43 = scmp.eq.s32.totalorder %s15, 1
      %p44 = por %p42, %p43
      %p45 = scmp.ne.s32.totalorder %s37, %s40
      %p46 = scmp.eq.s32.totalorder %s15, 0
      %p47 = por %p45, %p46
      %p48 = scmp.ne.s32.totalorder %s37, %s40
      %p49 = scmp.eq.s32.totalorder %s20, 1
      %p50 = por %p48, %p49
      %p51 = scmp.ne.s32.totalorder %s40, %s41
      %p52 = scmp.eq.s32.totalorder %s20, 0
      %p53 = por %p51, %p52
      %p54 = scmp.ne.s32.totalorder %s40, %s41
      %p55 = scmp.eq.s32.totalorder %s21, 1
      %p56 = por %p54, %p55
      %p58 = scmp.ne.s32.totalorder %s41, %s57
      %p59 = scmp.eq.s32.totalorder %s21, 0
      %p60 = por %p58, %p59
      %s61 = ssub.s32 %s22, %s34
      %p62 = scmp.eq.s32.totalorder %s61, 0
      %s64 = sadd.s32 %s63, 1
      %s65 = scalar_select %p62, %s63, %s64
      %p68 = pneg %p62
      %p69 = scmp.eq.s32.totalorder %s15, 1
      %p70 = por %p68, %p69
      %p71 = scmp.ne.s32.totalorder %s63, %s66
      %p72 = scmp.eq.s32.totalorder %s15, 0
      %p73 = por %p71, %p72
      %p74 = scmp.ne.s32.totalorder %s63, %s66
      %p75 = scmp.eq.s32.totalorder %s20, 1
      %p76 = por %p74, %p75
      %p77 = scmp.ne.s32.totalorder %s66, %s67
      %p78 = scmp.eq.s32.totalorder %s20, 0
      %p79 = por %p77, %p78
      %p80 = scmp.ne.s32.totalorder %s66, %s67
      %p81 = scmp.eq.s32.totalorder %s21, 1
      %p82 = por %p80, %p81
      %p84 = scmp.ne.s32.totalorder %s67, %s83
      %p85 = scmp.eq.s32.totalorder %s21, 0
      %p86 = por %p84, %p85
      %s87 = ssub.s32 %s23, %s30
      %p88 = scmp.eq.s32.totalorder %s87, 0
      %s90 = sadd.s32 %s89, 1
      %s91 = scalar_select %p88, %s89, %s90
      %p94 = pneg %p88
      %p95 = scmp.eq.s32.totalorder %s15, 1
      %p96 = por %p94, %p95
      %p97 = scmp.ne.s32.totalorder %s89, %s92
      %p98 = scmp.eq.s32.totalorder %s15, 0
      %p99 = por %p97, %p98
      %p100 = scmp.ne.s32.totalorder %s89, %s92
      %p101 = scmp.eq.s32.totalorder %s20, 1
      %p102 = por %p100, %p101
      %p103 = scmp.ne.s32.totalorder %s92, %s93
      %p104 = scmp.eq.s32.totalorder %s20, 0
      %p105 = por %p103, %p104
      %p106 = scmp.ne.s32.totalorder %s92, %s93
      %p107 = scmp.eq.s32.totalorder %s21, 1
      %p108 = por %p106, %p107
      %p110 = scmp.ne.s32.totalorder %s93, %s109
      %p111 = scmp.eq.s32.totalorder %s21, 0
      %p112 = por %p110, %p111
      %s113 = ssub.s32 %s22, %s34
      %s114 = ssub.s32 %s23, %s30
      %s115 = sor.u32 %s113, %s114
      %p116 = scmp.eq.s32.totalorder %s115, 0
      %s118 = sadd.s32 %s117, 1
      %s119 = scalar_select %p116, %s117, %s118
      %p122 = pneg %p116
      %p123 = scmp.eq.s32.totalorder %s15, 1
      %p124 = por %p122, %p123
      %p125 = scmp.ne.s32.totalorder %s117, %s120
      %p126 = scmp.eq.s32.totalorder %s15, 0
      %p127 = por %p125, %p126
      %p128 = scmp.ne.s32.totalorder %s117, %s120
      %p129 = scmp.eq.s32.totalorder %s20, 1
      %p130 = por %p128, %p129
      %p131 = scmp.ne.s32.totalorder %s120, %s121
      %p132 = scmp.eq.s32.totalorder %s20, 0
      %p133 = por %p131, %p132
      %p134 = scmp.ne.s32.totalorder %s120, %s121
      %p135 = scmp.eq.s32.totalorder %s21, 1
      %p136 = por %p134, %p135
      %p138 = scmp.ne.s32.totalorder %s121, %s137
      %p139 = scmp.eq.s32.totalorder %s21, 0
      %p140 = por %p138, %p139
      %p141 = scmp.le.s32.totalorder 1, %s15
      %p142 = scmp.lt.s32.totalorder %s15, 3
      %p143 = pnand %p141, %p142
      %p144 = pneg %p143
      // Predicated region
      $region9: #{tpu_custom_call.1} parent=5 // pred_check
        _
      $region10: #{tpu_custom_call.1} parent=5 // pred_check_branch
        %146 = sbr.rel (%p143) target = $region12
      $region11: #{tpu_custom_call.1} parent=5 // pred_region
        %s147 = ssub.s32 %s15, 1
        // Predicated region
        $region13: #{tpu_custom_call.1} parent=11 // pred_check
          %p148 = pneg %p53
        $region14: #{tpu_custom_call.1} parent=11 // pred_check_branch
          %150 = sbr.rel (%p148) target = $region16
        $region15: #{tpu_custom_call.1} parent=11 // pred_region
          %p151 = scmp.lt.s32.totalorder %s24, 0
          %s152 = scalar_select %p151, %s24, 0
          %s153 = smul.addr %s152, 4
          %s154 = scalar_lea.vmem %s0, %s153
        $region16: #{tpu_custom_call.1} parent=11 // pred_fallthru
          _
        // Predicated region
        $region17: #{tpu_custom_call.1} parent=11 // pred_check
          %p155 = pneg %p79
        $region18: #{tpu_custom_call.1} parent=11 // pred_check_branch
          %157 = sbr.rel (%p155) target = $region20
        $region19: #{tpu_custom_call.1} parent=11 // pred_region
          %p158 = scmp.lt.s32.totalorder %s24, 0
          %s159 = scalar_select %p158, %s24, 0
          %s160 = smul.addr %s159, 8
          %s161 = scalar_lea.vmem %s1, %s160
        $region20: #{tpu_custom_call.1} parent=11 // pred_fallthru
          _
      $region12: #{tpu_custom_call.1} parent=5 // pred_fallthru
        _
      %p162 = scmp.lt.s32.totalorder %s15, 2
      // Predicated region
      $region21: #{tpu_custom_call.1} parent=5 // pred_check
        %p163 = pneg %p162
      $region22: #{tpu_custom_call.1} parent=5 // pred_check_branch
        %165 = sbr.rel (%p163) target = $region24
      $region23: #{tpu_custom_call.1} parent=5 // pred_region
        // Predicated region
        $region25: #{tpu_custom_call.1} parent=23 // pred_check
          %p166 = pneg %p99
        $region26: #{tpu_custom_call.1} parent=23 // pred_check_branch
          %168 = sbr.rel (%p166) target = $region28
        $region27: #{tpu_custom_call.1} parent=23 // pred_region
          %s169 = sand.u32 %s89, 1
          %s170 = scalar_lea.sflag [#allocation3], %s169
          %s171 = sand.u32 %s89, 1
          %s172 = smul.addr %s171, 40
          %s173 = scalar_lea.vmem [#allocation2], %s172
          %s174 = smul.u32 2, %s23
          %s176 = ssub.s32 640, 640
          %177 = vsyncadd %s170, %s176
          %s178 = smul.addr %s174, 64
          %s179 = scalar_lea.hbm %s2, %s178
          %s180 = sshll.u32 %s173, 4
          %s181 = int_to_ptr.vmem [resolvable:$true] %s180
          %186 = dma.hbm_to_vmem [thread:$0]  %s179, 640, %s181, %s170, 256, 128, 8
        $region28: #{tpu_custom_call.1} parent=23 // pred_fallthru
          _
      $region24: #{tpu_custom_call.1} parent=5 // pred_fallthru
        _
      %p187 = scmp.le.s32.totalorder 1, %s15
      %p188 = scmp.lt.s32.totalorder %s15, 3
      %p189 = pnand %p187, %p188
      %p190 = pneg %p189
      // Predicated region
      $region29: #{tpu_custom_call.1} parent=5 // pred_check
        _
      $region30: #{tpu_custom_call.1} parent=5 // pred_check_branch
        %192 = sbr.rel (%p189) target = $region32
      $region31: #{tpu_custom_call.1} parent=5 // pred_region
        %s193 = ssub.s32 %s15, 1
        %s194 = sand.u32 %s92, 1
        %s195 = scalar_lea.sflag [#allocation3], %s194
        %s196 = sand.u32 %s92, 1
        %s197 = smul.addr %s196, 40
        %s198 = scalar_lea.vmem [#allocation2], %s197
        // Predicated region
        $region33: #{tpu_custom_call.1} parent=31 // pred_check
          %p199 = pneg %p105
        $region34: #{tpu_custom_call.1} parent=31 // pred_check_branch
          %201 = sbr.rel (%p199) target = $region36
        $region35: #{tpu_custom_call.1} parent=31 // pred_region
          %202 = dma.done %s195, 640
        $region36: #{tpu_custom_call.1} parent=31 // pred_fallthru
          _
        %p203 = scmp.lt.s32.totalorder %s24, 0
        %s204 = scalar_select %p203, %s24, 0
        %s205 = smul.addr %s204, 4
        %s206 = scalar_lea.vmem %s0, %s205
        %p207 = pneg %p53
        %p208 = pneg %p50
        %p209 = scmp.lt.s32.totalorder %s24, 0
        %s210 = scalar_select %p209, %s24, 0
        %s211 = smul.addr %s210, 8
        %s212 = scalar_lea.vmem %s1, %s211
        %p213 = pneg %p79
        %p214 = pneg %p76
        %s215 = sand.u32 %s92, 1
        %s216 = scalar_lea.sflag [#allocation3], %s215
        %s217 = sand.u32 %s92, 1
        %s218 = smul.addr %s217, 40
        %s219 = scalar_lea.vmem [#allocation2], %s218
        %p220 = pneg %p105
        %p221 = pneg %p102
        %p222 = pneg %p133
        %p223 = pneg %p130
        %s224 = sand.u32 %s120, 1
        %s225 = scalar_lea.sflag [#allocation4], %s224
        %s226 = sand.u32 %s120, 1
        %s227 = smul.addr %s226, 16
        %s228 = scalar_lea.vmem [#allocation5], %s227
        %p229 = scmp.lt.s32.totalorder %s24, 0
        %s230 = scalar_select %p229, %s24, 0
        %s231 = smul.addr %s230, 4
        %s232 = scalar_lea.vmem %s0, %s231
        %p233 = scmp.lt.s32.totalorder %s24, 0
        %s234 = scalar_select %p233, %s24, 0
        %s235 = smul.addr %s234, 8
        %s236 = scalar_lea.vmem %s1, %s235
        %s237 = smul.u32 2, %s25
        %s238 = smul.u32 2, %s25
        %v240 = vld [vmem:[%s232] sm:$0xf]
        %v241 = vld [vmem:[%s198] sm:$0xff]
        %v242 = vld [vmem:[%s198 + $0x8] sm:$0xff]
        %v243 = vld [vmem:[%s198 + $0x10] sm:$0xff]
        %v244 = vld [vmem:[%s198 + $0x18] sm:$0xff]
        %v245 = vld [vmem:[%s198 + $0x20] sm:$0x33]
        %v246 = vld [vmem:[%s236] sm:$0xff]
        %248 = vset.pattern.permute.xlu0 0
        %249 = vperm.xlu0 %248, %v246
        %v250 = vpop.permute.xlu0 %249
        %v257 = vunpack.c.l.b16 %v241
        %v258 = vunpack.c.h.b16 %v241
        %v259 = vunpack.c.l.b16 %v242
        %v260 = vunpack.c.h.b16 %v242
        %v261 = vunpack.c.l.b16 %v243
        %v262 = vunpack.c.h.b16 %v243
        %v263 = vunpack.c.l.b16 %v244
        %v264 = vunpack.c.h.b16 %v244
        %v265 = vunpack.c.l.b16 %v245
        %v266 = vunpack.c.h.b16 %v245
        %v267 = vpack.c.b16 %v259, %v257
        %v268 = vpack.c.b16 %v260, %v258
        %v269 = vpack.c.b16 %v263, %v261
        %v270 = vpack.c.b16 %v264, %v262
        %v271 = vpack.c.b16 %v265, %v265
        %v272 = vpack.c.b16 %v266, %v266
        %vm277 = vcmask 293888
        %v279 = vsel %vm277, %v240, 0
        %vm281 = vcmask 1041408
        %v283 = vsel %vm281, %v271, 0
        %v286 = vsel %vm281, %v272, 0
        %288 = vmatprep.subr.bf16.mxu0 %v268
        %289 = vmatpush1.bf16.msra.mxu0 %v267
        %290 = vmatprep.subr.bf16.mxu0 %v270
        %291 = vmatpush1.bf16.msra.mxu0 %v269
        %292 = vmatprep.subr.bf16.mxu0 %v286
        %293 = vmatpush1.bf16.msra.mxu0 %v283
        %294 = vmatprep.subr.bf16.mxu0 0
        %295 = vmatpush1.bf16.msra.mxu0 0
        %296 = vmatprep.subr.bf16.mxu0 0
        %297 = vmatpush1.bf16.msra.mxu0 0
        %298 = vmatprep.subr.bf16.mxu0 0
        %299 = vmatpush1.bf16.msra.mxu0 0
        %300 = vmatprep.subr.bf16.mxu0 0
        %301 = vmatpush1.bf16.msra.mxu0 0
        %302 = vmatprep.subr.bf16.mxu0 0
        %303 = vmatpush1.bf16.msra.mxu0 0
        %304 = vmatprep.subr.bf16.mxu0 0
        %305 = vmatpush1.bf16.msra.mxu0 0
        %306 = vmatprep.subr.bf16.mxu0 0
        %307 = vmatpush1.bf16.msra.mxu0 0
        %308 = vmatprep.subr.bf16.mxu0 0
        %309 = vmatpush1.bf16.msra.mxu0 0
        %310 = vmatprep.subr.bf16.mxu0 0
        %311 = vmatpush1.bf16.msra.mxu0 0
        %312 = vmatprep.subr.bf16.mxu0 0
        %313 = vmatpush1.bf16.msra.mxu0 0
        %314 = vmatprep.subr.bf16.mxu0 0
        %315 = vmatpush1.bf16.msra.mxu0 0
        %316 = vmatprep.subr.bf16.mxu0 0
        %317 = vmatpush1.bf16.msra.mxu0 0
        %318 = vmatprep.subr.bf16.mxu0 0
        %319 = vmatpush1.bf16.msra.mxu0 0
        %320 = vmatprep.mubr.bf16.mxu0 0
        %321 = vmatmul.mubr.bf16.gmra.mrb[0].mxu0 %v279
        %v322 = vpop.f32.mrb[0].mxu0
        %v323 = vadd.f32 %v250, %v322
        %v324 = vpop.f32.mrb[0].mxu0
        %v325 = vadd.f32 %v250, %v324
        %v326 = vpop.f32.mrb[0].mxu0
        %v327 = vpop.f32.mrb[0].mxu0
        %328 = vdwg.mxu0
        %v329 = vmax.f32 %v323, 0.0
        %v330 = vmax.f32 %v325, 0.0
        %331 = vst [vmem:[%s228] sm:$0xff] %v329
        %332 = vst [vmem:[%s228 + $0x8] sm:$0xff] %v330
        %s333 = sand.u32 %s120, 1
        %s334 = scalar_lea.sflag [#allocation4], %s333
        %s335 = sand.u32 %s120, 1
        %s336 = smul.addr %s335, 16
        %s337 = scalar_lea.vmem [#allocation5], %s336
        // Predicated region
        $region37: #{tpu_custom_call.1} parent=31 // pred_check
          %p338 = pneg %p130
        $region38: #{tpu_custom_call.1} parent=31 // pred_check_branch
          %340 = sbr.rel (%p338) target = $region40
        $region39: #{tpu_custom_call.1} parent=31 // pred_region
          %s341 = smul.u32 2, %s25
          %s343 = ssub.s32 256, 256
          %344 = vsyncadd %s334, %s343
          %s345 = smul.addr %s24, 4
          %s346 = sadd.s32 %s341, %s345
          %s347 = smul.addr %s346, 128
          %s348 = scalar_lea.hbm %s3, %s347
          %s350 = sshll.u32 %s337, 4
          %s351 = int_to_ptr.vmem [resolvable:$true] %s350
          %353 = dma.vmem_to_hbm [thread:$0]  %s351, 256, %s348, %s334
        $region40: #{tpu_custom_call.1} parent=31 // pred_fallthru
          _
      $region32: #{tpu_custom_call.1} parent=5 // pred_fallthru
        _
      %p354 = scmp.le.s32.totalorder 2, %s15
      // Predicated region
      $region41: #{tpu_custom_call.1} parent=5 // pred_check
        %p355 = pneg %p354
      $region42: #{tpu_custom_call.1} parent=5 // pred_check_branch
        %357 = sbr.rel (%p355) target = $region44
      $region43: #{tpu_custom_call.1} parent=5 // pred_region
        %s358 = ssub.s32 %s15, 2
        // Predicated region
        $region45: #{tpu_custom_call.1} parent=43 // pred_check
          %p359 = pneg %p136
        $region46: #{tpu_custom_call.1} parent=43 // pred_check_branch
          %361 = sbr.rel (%p359) target = $region48
        $region47: #{tpu_custom_call.1} parent=43 // pred_region
          %s362 = sand.u32 %s121, 1
          %s363 = scalar_lea.sflag [#allocation4], %s362
          %s364 = sand.u32 %s121, 1
          %s365 = smul.addr %s364, 16
          %s366 = scalar_lea.vmem [#allocation5], %s365
          %367 = dma.done %s363, 256
        $region48: #{tpu_custom_call.1} parent=43 // pred_fallthru
          _
      $region44: #{tpu_custom_call.1} parent=5 // pred_fallthru
        _
    $region6: #{tpu_custom_call.1} parent=1 // loop_footer
      %s19 = sadd.s32 1, %s15
    $region7: #{tpu_custom_call.1} parent=1 // loop_footer_branch
      %14 = sbr.rel target = $region3
    $region8: #{tpu_custom_call.1} parent=1 // loop_exit
      _
    %368 = vsyncpa [#allocation3], 1
    %s369 = scalar_lea.sflag [#allocation3], 1
    %370 = vsyncpa %s369, 1
    %371 = vsyncpa [#allocation4], 1
    %s372 = scalar_lea.sflag [#allocation4], 1
    %373 = vsyncpa %s372, 1

</llo_original>
